<compile_context>
chip_gen: v5e
topology: v5e:2x2
jax: 0.10.0
libtpu: 0.0.40
codegen_flags: <defaults>
</compile_context>

<pallas_src>
import functools

import jax
import jax.numpy as jnp
import numpy as np
from jax.experimental import pallas as pl
from jax.experimental.pallas import tpu as pltpu


def _obj_conf_max_kernel(x_ref, out_ref, acc_ref, *, block_rows, num_anchors):
    """Grid = (batch, anchor_tiles).

    acc_ref holds the running elementwise max of obj * x over anchor tiles
    (VPU only in the hot loop); the cross-sublane reduction runs once per
    image in the epilogue.
    """
    t = pl.program_id(1)

    @pl.when(t == 0)
    def _init():
        acc_ref[...] = jnp.full(acc_ref.shape, -jnp.inf, dtype=acc_ref.dtype)

    x = x_ref[0].astype(jnp.float32)          # (TA, D) tile of one image
    conf = x * x[:, 4:5]                      # broadcast objectness (col 4) over all D columns

    # Mask anchors past the true extent (only matters when A % TA != 0).
    row = jax.lax.broadcasted_iota(jnp.int32, conf.shape, 0) + t * block_rows
    conf = jnp.where(row < num_anchors, conf, -jnp.inf)

    acc_ref[...] = jnp.maximum(acc_ref[...], conf)

    @pl.when(t == pl.num_programs(1) - 1)
    def _finalize():
        # Single sublane reduction per image -> (1, 1, D) output block.
        out_ref[...] = jnp.max(acc_ref[...], axis=0, keepdims=True)[None].astype(out_ref.dtype)


def obj_conf_column_max(output, *, block_rows=None, use_kernel=None):
    """For every column c: max over anchors of output[..., 4] * output[..., c].

    output: (B, A, 5 + num_cls). Returns (B, 5 + num_cls) float32.
    Columns 0..4 (boxes / objectness) are ignored by the caller.
    """
    b, a, d = output.shape

    if use_kernel is None:
        # Tiny inputs: kernel launch + grid overhead dominates; let XLA fuse it.
        use_kernel = output.size >= 64 * 1024
    if not use_kernel:
        x = output.astype(jnp.float32)
        return jnp.max(x * x[:, :, 4:5], axis=1)

    if block_rows is None:
        # ~2 MiB per input block: big enough to amortize per-step overhead,
        # small enough (x2 double-buffer + acc scratch) for v5e/v6e/v7x VMEM.
        target_bytes = 2 * 1024 * 1024
        block_rows = max(8, (target_bytes // (d * 4)) // 8 * 8)
    ta = a if a <= block_rows else block_rows
    n_tiles = pl.cdiv(a, ta)

    kernel = functools.partial(_obj_conf_max_kernel, block_rows=ta, num_anchors=a)

    out = pl.pallas_call(
        kernel,
        out_shape=jax.ShapeDtypeStruct((b, 1, d), jnp.float32),
        grid_spec=pltpu.PrefetchScalarGridSpec(
            num_scalar_prefetch=0,
            grid=(b, n_tiles),
            in_specs=[pl.BlockSpec((1, ta, d), lambda i, t: (i, t, 0))],
            out_specs=pl.BlockSpec((1, 1, d), lambda i, t: (i, 0, 0)),
            scratch_shapes=[pltpu.VMEM((ta, d), jnp.float32)],
        ),
        compiler_params=pltpu.CompilerParams(
            dimension_semantics=("parallel", "arbitrary"),
            vmem_limit_bytes=32 * 1024 * 1024,
        ),
    )(output)
    return out[:, 0, :]


def detections_yolov5_forward(lab_batch, output, clean_conf, *, cls_id,
                              attack_class_id, conf_threshold,
                              block_rows=None, use_kernel=None):
    """JAX/Pallas port of DetectionsYolov5.forward.

    lab_batch : (B, max_lab, L) labels; [..., 0] is the class id (< 0 = padding).
    output    : (B, A, 5 + num_cls) raw YOLOv5 head output.
    clean_conf: (B, num_cls) clean-image confidences (the clean_img_conf dict,
                keyed by img_names, densified on the host).
    Returns (max_conf (B,), per_image_loss (B,), has_ids (B,) bool).
    The torch module returns a ragged `total_loss`; assemble it host-side with
    `assemble_total_loss`.
    """
    b, a, d = output.shape
    num_cls = d - 5

    col_max = obj_conf_column_max(output, block_rows=block_rows, use_kernel=use_kernel)
    per_class_max = col_max[:, 5:]                       # (B, num_cls) = max_a obj*cls
    max_conf = per_class_max[:, cls_id]                  # (B,) attacked-class conf

    # ---- get_correct_ids, vectorized over the batch (tiny (B, num_cls) glue) ----
    lab = lab_batch[..., 0]                              # (B, max_lab)
    cls_ids_i = jnp.arange(num_cls, dtype=jnp.int32)
    cls_ids = cls_ids_i.astype(lab.dtype)
    present = jnp.any((lab[:, :, None] == cls_ids[None, None, :])
                      & (lab[:, :, None] >= 0), axis=1)          # (B, num_cls)
    present = present & (cls_ids_i[None, :] != attack_class_id)
    valid = present & (clean_conf > conf_threshold)              # (B, num_cls)

    diff = jnp.abs(clean_conf.astype(jnp.float32) - per_class_max)
    count = jnp.sum(valid, axis=1)
    per_image_loss = (jnp.sum(diff * valid.astype(jnp.float32), axis=1)
                      / jnp.maximum(count, 1).astype(jnp.float32))
    has_ids = count > 0
    return max_conf, per_image_loss, has_ids


def assemble_total_loss(per_image_loss, has_ids):
    # TODO(synk): the torch module returns a ragged, data-dependent-length
    # tensor; that cannot be expressed inside jit/Pallas, so it is assembled
    # host-side from the fixed-size per-image losses + validity mask.
    mask = np.asarray(has_ids)
    vals = np.asarray(per_image_loss)[mask]
    if vals.size == 0:
        return jnp.zeros((1,), jnp.float32)
    return jnp.asarray(vals, dtype=jnp.float32)


if __name__ == "__main__":
    B, A, NUM_CLS, MAX_LAB = 2, 512, 11, 8
    D = 5 + NUM_CLS
    CLS_ID = 3            # self.cls_id (attacked class)
    ATTACK_CLASS_ID = 3   # self.config.class_id (excluded from get_correct_ids)
    CONF_THRESHOLD = 0.3

    key = jax.random.PRNGKey(0)
    k_out, k_lab, k_box, k_clean = jax.random.split(key, 4)

    output = jax.random.uniform(k_out, (B, A, D), dtype=jnp.float32)
    lab_cls = jax.random.randint(k_lab, (B, MAX_LAB), -1, NUM_CLS).astype(jnp.float32)
    lab_batch = jnp.concatenate(
        [lab_cls[..., None], jax.random.uniform(k_box, (B, MAX_LAB, 4), dtype=jnp.float32)],
        axis=-1)
    # Guarantee at least one image has a "correct id" above the clean threshold.
    lab_batch = lab_batch.at[0, 0, 0].set(5.0)
    clean_conf = jax.random.uniform(k_clean, (B, NUM_CLS), dtype=jnp.float32)
    clean_conf = clean_conf.at[0, 5].set(0.9)

    max_conf, per_image_loss, has_ids = detections_yolov5_forward(
        lab_batch, output, clean_conf,
        cls_id=CLS_ID, attack_class_id=ATTACK_CLASS_ID, conf_threshold=CONF_THRESHOLD,
        block_rows=128,     # force a multi-tile anchor grid even at this small A
        use_kernel=True,    # force the Pallas path for this small test
    )
    max_conf = jax.block_until_ready(max_conf)
    per_image_loss = jax.block_until_ready(per_image_loss)
    total_loss = assemble_total_loss(per_image_loss, has_ids)

    # ---- pure JAX/numpy reference (mirrors the torch module) ----
    out_t = jnp.swapaxes(output, 1, 2)                     # (B, D, A)
    obj_ref = out_t[:, 4, :]
    cls_ref = out_t[:, 5:, :]
    per_class_max_ref = jnp.max(obj_ref[:, None, :] * cls_ref, axis=-1)   # (B, num_cls)
    max_conf_ref = per_class_max_ref[:, CLS_ID]

    total_loss_ref = []
    for i in range(B):
        labs_i = np.asarray(lab_batch[i, :, 0])
        ids = np.unique(labs_i[(labs_i >= 0) & (labs_i != ATTACK_CLASS_ID)]).astype(int)
        clean_i = np.asarray(clean_conf[i])
        ids = ids[clean_i[ids] > CONF_THRESHOLD]
        if ids.size == 0:
            continue
        max_patch = np.asarray(per_class_max_ref[i])[ids]
        total_loss_ref.append(float(np.mean(np.abs(clean_i[ids] - max_patch))))
    if not total_loss_ref:
        total_loss_ref = [0.0]
    total_loss_ref = np.asarray(total_loss_ref, np.float32)

    assert jnp.allclose(max_conf, max_conf_ref, atol=1e-5), (max_conf, max_conf_ref)
    assert np.allclose(np.asarray(total_loss), total_loss_ref, atol=1e-5), (total_loss, total_loss_ref)

    print("KERNEL_OK")
</pallas_src>

<mosaic_0001>
module attributes {stable_mosaic.version = 11 : i64} {
  func.func @_obj_conf_max_kernel(%arg0: i32, %arg1: i32, %arg2: memref<1x128x16xf32, #tpu.memory_space<vmem>>, %arg3: memref<1x1x16xf32, #tpu.memory_space<vmem>>, %arg4: memref<128x16xf32, #tpu.memory_space<vmem>>) attributes {dimension_semantics = [#tpu.dimension_semantics<parallel>, #tpu.dimension_semantics<arbitrary>], iteration_bounds = array<i64: 2, 4>, scalar_prefetch = 0 : i64, scratch_operands = 1 : i64, tpu.core_type = #tpu.core_type<tc>, window_params = [{transform_indices = @transform_0, window_bounds = array<i64: 1, 128, 16>}, {transform_indices = @transform_1, window_bounds = array<i64: 1, 1, 16>}]} {
    %c0_i32 = arith.constant 0 : i32
    %0 = arith.cmpi eq, %arg1, %c0_i32 : i32
    %1 = arith.extui %0 : i1 to i32
    %c0_i32_0 = arith.constant 0 : i32
    %2 = arith.cmpi ne, %1, %c0_i32_0 : i32
    scf.if %2 {
      %cst_8 = arith.constant 0xFF800000 : f32
      %22 = vector.broadcast %cst_8 : f32 to vector<128x16xf32>
      %c0_9 = arith.constant 0 : index
      %c0_10 = arith.constant 0 : index
      %23 = vector.load %arg4[%c0_9, %c0_10] : memref<128x16xf32, #tpu.memory_space<vmem>>, vector<128x16xf32>
      tpu.vector_store %arg4[%c0_9, %c0_10], %22 {strides = array<i32>} : memref<128x16xf32, #tpu.memory_space<vmem>>, vector<128x16xf32>,
    } else {
    }
    %c0 = arith.constant 0 : index
    %c0_1 = arith.constant 0 : index
    %c0_2 = arith.constant 0 : index
    %3 = vector.load %arg2[%c0, %c0_1, %c0_2] : memref<1x128x16xf32, #tpu.memory_space<vmem>>, vector<1x128x16xf32>
    %4 = vector.shape_cast %3 : vector<1x128x16xf32> to vector<128x16xf32>
    %5 = vector.extract_strided_slice %4 {offsets = [0, 4], sizes = [128, 1], strides = [1, 1]} : vector<128x16xf32> to vector<128x1xf32>
    %6 = vector.broadcast %5 : vector<128x1xf32> to vector<128x16xf32>
    %7 = arith.mulf %4, %6 : vector<128x16xf32>
    %8 = tpu.iota {dimensions = array<i32: 0>} : vector<128x16xi32>
    %c128_i32 = arith.constant 128 : i32
    %9 = arith.muli %arg1, %c128_i32 : i32
    %10 = vector.broadcast %9 : i32 to vector<128x16xi32>
    %11 = arith.addi %8, %10 : vector<128x16xi32>
    %c512_i32 = arith.constant 512 : i32
    %12 = vector.broadcast %c512_i32 : i32 to vector<128x16xi32>
    %13 = arith.cmpi slt, %11, %12 : vector<128x16xi32>
    %cst = arith.constant 0xFF800000 : f32
    %14 = vector.broadcast %cst : f32 to vector<128x16xf32>
    %15 = arith.select %13, %7, %14 : vector<128x16xi1>, vector<128x16xf32>
    %c0_3 = arith.constant 0 : index
    %c0_4 = arith.constant 0 : index
    %16 = vector.load %arg4[%c0_3, %c0_4] : memref<128x16xf32, #tpu.memory_space<vmem>>, vector<128x16xf32>
    %17 = arith.maximumf %16, %15 : vector<128x16xf32>
    %c0_5 = arith.constant 0 : index
    %c0_6 = arith.constant 0 : index
    %18 = vector.load %arg4[%c0_5, %c0_6] : memref<128x16xf32, #tpu.memory_space<vmem>>, vector<128x16xf32>
    tpu.vector_store %arg4[%c0_5, %c0_6], %17 {strides = array<i32>} : memref<128x16xf32, #tpu.memory_space<vmem>>, vector<128x16xf32>,
    %c3_i32 = arith.constant 3 : i32
    %19 = arith.cmpi eq, %arg1, %c3_i32 : i32
    %20 = arith.extui %19 : i1 to i32
    %c0_i32_7 = arith.constant 0 : i32
    %21 = arith.cmpi ne, %20, %c0_i32_7 : i32
    scf.if %21 {
      %c0_8 = arith.constant 0 : index
      %c0_9 = arith.constant 0 : index
      %22 = vector.load %arg4[%c0_8, %c0_9] : memref<128x16xf32, #tpu.memory_space<vmem>>, vector<128x16xf32>
      %cst_10 = arith.constant dense<0xFF800000> : vector<16xf32>
      %23 = vector.multi_reduction <maximumf>, %22, %cst_10 [0] : vector<128x16xf32> to vector<16xf32>
      %24 = vector.shape_cast %23 : vector<16xf32> to vector<1x16xf32>
      %25 = vector.shape_cast %24 : vector<1x16xf32> to vector<1x1x16xf32>
      %c0_11 = arith.constant 0 : index
      %c0_12 = arith.constant 0 : index
      %c0_13 = arith.constant 0 : index
      %26 = vector.load %arg3[%c0_11, %c0_12, %c0_13] : memref<1x1x16xf32, #tpu.memory_space<vmem>>, vector<1x1x16xf32>
      tpu.vector_store %arg3[%c0_11, %c0_12, %c0_13], %25 {strides = array<i32>} : memref<1x1x16xf32, #tpu.memory_space<vmem>>, vector<1x1x16xf32>,
    } else {
    }
    return
  }
  func.func @transform_0(%arg0: i32, %arg1: i32) -> (i32, i32, i32) {
    %c0_i32 = arith.constant 0 : i32
    %c0_i32_0 = arith.constant 0 : i32
    return %arg0, %arg1, %c0_i32 : i32, i32, i32
  }
  func.func @transform_1(%arg0: i32, %arg1: i32) -> (i32, i32, i32) {
    %c0_i32 = arith.constant 0 : i32
    %c0_i32_0 = arith.constant 0 : i32
    %c0_i32_1 = arith.constant 0 : i32
    return %arg0, %c0_i32, %c0_i32_0 : i32, i32, i32
  }
}

</mosaic_0001>

<llo_original>
// kernel: tpu_custom_call.1
$region0: #{tpu_custom_call.1}
  #allocation0 [shape = 'u32[]', space=smem, size = 0x4, offset = 0x4, fixed_abs, tag = 'smem constant byte address 0x4 - core index']
  #allocation1 [shape = 'u32[72,128]{1,0:T(1,128)}', space=vmem, size = 0x9000, scoped, tag = 'internal scratch']
  #allocation2 [shape = 'f32[128,16]{1,0:T(8,128)}', space=vmem, size = 0x10000, scoped, tag = 'scratch operand']
  %s0 = inlined_call_operand.vmem [shape: f32[2,512,16], index: 0, kind: input, shape index: {}]
  %s1 = inlined_call_operand.hbm [shape: f32[2,1,16], index: 1, kind: output, shape index: {}]
  %s2 = sld [smem:[#allocation0]]
  $region45: #{tpu_custom_call.1} parent=0
    _
  %s4 = ssub.s32 1, %s2
  %s5 = scalar_select 0, %s4, %s2
  $region1: #{tpu_custom_call.1} parent=0
    #allocation3 [shape = 'u8[1024]{0}', space=vmem, size = 0x400, scoped, tag = 'output window, operand 0']
    #allocation4 [shape = 's32[2]{0}', space=sflag, size = 0x8, scoped, tag = 'scoped memory for tpu_custom_call.1']
    %6 = vsyncpa [#allocation4], 0
    %s7 = scalar_lea.sflag [#allocation4], 1
    %8 = vsyncpa %s7, 0
    loop: start=0, step=1, limit=10
    $region2: #{tpu_custom_call.1} parent=1 // loop_pre_header
      _
    $region3: #{tpu_custom_call.1} parent=1 // loop_header
      %s10 = sphi 0, %s14
      %p11 = scmp.ge.s32.totalorder %s10, 10
      %s17 = sphi 0, %s29
      %s18 = sphi 0, %s25
      %s19 = sphi 0, %s17
      %s20 = sphi 0, %s18
      %s21 = sphi 0, %s19
      %s22 = sphi 0, %s20
      %s34 = sphi 0, %s36
      %s37 = sphi 0, %s34
      %s38 = sphi 0, %s37
      %s54 = sphi 0, %s38
      %s60 = sphi 0, %s62
      %s63 = sphi 0, %s60
      %s64 = sphi 0, %s63
      %s80 = sphi 0, %s64
    $region4: #{tpu_custom_call.1} parent=1 // loop_header_branch
      %13 = sbr.rel (%p11) target = $region8
    $region5: #{tpu_custom_call.1} parent=1 // loop_body
      %s15 = ssub.s32 %s10, 1
      %s16 = ssub.s32 %s10, 2
      %s23 = sadd.s32 1, %s18
      %p24 = scmp.ge.s32.totalorder %s23, 4
      %s25 = scalar_select %p24, 0, %s23
      %s26 = sadd.s32 1, %s17
      %s27 = scalar_select %p24, %s26, %s17
      %p28 = scmp.ge.s32.totalorder %s27, 2
      %s29 = scalar_select %p28, 0, %s27
      %s30 = ssub.s32 %s17, %s29
      %s31 = ssub.s32 %s18, %s25
      %s32 = sor.u32 %s30, %s31
      %p33 = scmp.eq.s32.totalorder %s32, 0
      %s35 = sadd.s32 %s34, 1
      %s36 = scalar_select %p33, %s34, %s35
      %p39 = pneg %p33
      %p40 = scmp.eq.s32.totalorder %s10, 7
      %p41 = por %p39, %p40
      %p42 = scmp.ne.s32.totalorder %s34, %s37
      %p43 = scmp.eq.s32.totalorder %s10, 0
      %p44 = por %p42, %p43
      %p45 = scmp.ne.s32.totalorder %s34, %s37
      %p46 = scmp.eq.s32.totalorder %s15, 7
      %p47 = por %p45, %p46
      %p48 = scmp.ne.s32.totalorder %s37, %s38
      %p49 = scmp.eq.s32.totalorder %s15, 0
      %p50 = por %p48, %p49
      %p51 = scmp.ne.s32.totalorder %s37, %s38
      %p52 = scmp.eq.s32.totalorder %s16, 7
      %p53 = por %p51, %p52
      %p55 = scmp.ne.s32.totalorder %s38, %s54
      %p56 = scmp.eq.s32.totalorder %s16, 0
      %p57 = por %p55, %p56
      %s58 = ssub.s32 %s17, %s29
      %p59 = scmp.eq.s32.totalorder %s58, 0
      %s61 = sadd.s32 %s60, 1
      %s62 = scalar_select %p59, %s60, %s61
      %p65 = pneg %p59
      %p66 = scmp.eq.s32.totalorder %s10, 7
      %p67 = por %p65, %p66
      %p68 = scmp.ne.s32.totalorder %s60, %s63
      %p69 = scmp.eq.s32.totalorder %s10, 0
      %p70 = por %p68, %p69
      %p71 = scmp.ne.s32.totalorder %s60, %s63
      %p72 = scmp.eq.s32.totalorder %s15, 7
      %p73 = por %p71, %p72
      %p74 = scmp.ne.s32.totalorder %s63, %s64
      %p75 = scmp.eq.s32.totalorder %s15, 0
      %p76 = por %p74, %p75
      %p77 = scmp.ne.s32.totalorder %s63, %s64
      %p78 = scmp.eq.s32.totalorder %s16, 7
      %p79 = por %p77, %p78
      %p81 = scmp.ne.s32.totalorder %s64, %s80
      %p82 = scmp.eq.s32.totalorder %s16, 0
      %p83 = por %p81, %p82
      %p84 = scmp.le.s32.totalorder 1, %s10
      %p85 = scmp.lt.s32.totalorder %s10, 9
      %p86 = pnand %p84, %p85
      %p87 = pneg %p86
      // Predicated region
      $region9: #{tpu_custom_call.1} parent=5 // pred_check
        _
      $region10: #{tpu_custom_call.1} parent=5 // pred_check_branch
        %89 = sbr.rel (%p86) target = $region12
      $region11: #{tpu_custom_call.1} parent=5 // pred_region
        %s90 = ssub.s32 %s10, 1
      $region12: #{tpu_custom_call.1} parent=5 // pred_fallthru
        _
      %p91 = scmp.lt.s32.totalorder %s10, 8
      // Predicated region
      $region13: #{tpu_custom_call.1} parent=5 // pred_check
        %p92 = pneg %p91
      $region14: #{tpu_custom_call.1} parent=5 // pred_check_branch
        %94 = sbr.rel (%p92) target = $region16
      $region15: #{tpu_custom_call.1} parent=5 // pred_region
        // Predicated region
        $region17: #{tpu_custom_call.1} parent=15 // pred_check
          %p95 = pneg %p44
        $region18: #{tpu_custom_call.1} parent=15 // pred_check_branch
          %97 = sbr.rel (%p95) target = $region20
        $region19: #{tpu_custom_call.1} parent=15 // pred_region
          %s98 = smul.u32 16, %s18
          %p99 = scmp.lt.s32.totalorder %s17, 1
          %s100 = scalar_select %p99, %s17, 1
          %p101 = scmp.lt.s32.totalorder %s98, 63
          %s102 = scalar_select %p101, %s98, 63
          %s103 = smul.addr %s100, 64
          %s104 = sadd.s32 %s102, %s103
          %s105 = smul.addr %s104, 8
          %s106 = scalar_lea.vmem %s0, %s105
          %s107 = smul.u32 16, %s18
        $region20: #{tpu_custom_call.1} parent=15 // pred_fallthru
          _
      $region16: #{tpu_custom_call.1} parent=5 // pred_fallthru
        _
      %p108 = scmp.le.s32.totalorder 1, %s10
      %p109 = scmp.lt.s32.totalorder %s10, 9
      %p110 = pnand %p108, %p109
      %p111 = pneg %p110
      // Predicated region
      $region21: #{tpu_custom_call.1} parent=5 // pred_check
        _
      $region22: #{tpu_custom_call.1} parent=5 // pred_check_branch
        %113 = sbr.rel (%p110) target = $region24
      $region23: #{tpu_custom_call.1} parent=5 // pred_region
        %s114 = ssub.s32 %s10, 1
        %s115 = smul.u32 16, %s20
        %p116 = scmp.lt.s32.totalorder %s19, 1
        %s117 = scalar_select %p116, %s19, 1
        %p118 = scmp.lt.s32.totalorder %s115, 63
        %s119 = scalar_select %p118, %s115, 63
        %s120 = smul.addr %s117, 64
        %s121 = sadd.s32 %s119, %s120
        %s122 = smul.addr %s121, 8
        %s123 = scalar_lea.vmem %s0, %s122
        %p124 = pneg %p50
        %p125 = pneg %p47
        %p126 = pneg %p76
        %p127 = pneg %p73
        %s128 = sand.u32 %s63, 1
        %s129 = scalar_lea.sflag [#allocation4], %s128
        %s130 = sand.u32 %s63, 1
        %s131 = scalar_lea.vmem [#allocation3], %s130
        %s132 = smul.u32 16, %s20
        %p133 = scmp.lt.s32.totalorder %s19, 1
        %s134 = scalar_select %p133, %s19, 1
        %p135 = scmp.lt.s32.totalorder %s132, 63
        %s136 = scalar_select %p135, %s132, 63
        %s137 = smul.addr %s134, 64
        %s138 = sadd.s32 %s136, %s137
        %s139 = smul.addr %s138, 8
        %s140 = scalar_lea.vmem %s0, %s139
        %s141 = smul.u32 16, %s20
        %p142 = scmp.eq.s32.totalorder %s20, 0
        // Predicated region
        $region25: #{tpu_custom_call.1} parent=23 // pred_check
          %p143 = pneg %p142
        $region26: #{tpu_custom_call.1} parent=23 // pred_check_branch
          %145 = sbr.rel (%p143) target = $region28
        $region27: #{tpu_custom_call.1} parent=23 // pred_region
          %vm146 = vcmask 130048
          %147 = vst.msk [vmem:[#allocation2] sm:$0xff] %vm146, -inf
          %148 = vst.msk [vmem:[#allocation2 + $0x8] sm:$0xff] %vm146, -inf
          %149 = vst.msk [vmem:[#allocation2 + $0x10] sm:$0xff] %vm146, -inf
          %150 = vst.msk [vmem:[#allocation2 + $0x18] sm:$0xff] %vm146, -inf
          %151 = vst.msk [vmem:[#allocation2 + $0x20] sm:$0xff] %vm146, -inf
          %152 = vst.msk [vmem:[#allocation2 + $0x28] sm:$0xff] %vm146, -inf
          %153 = vst.msk [vmem:[#allocation2 + $0x30] sm:$0xff] %vm146, -inf
          %154 = vst.msk [vmem:[#allocation2 + $0x38] sm:$0xff] %vm146, -inf
          %155 = vst.msk [vmem:[#allocation2 + $0x40] sm:$0xff] %vm146, -inf
          %156 = vst.msk [vmem:[#allocation2 + $0x48] sm:$0xff] %vm146, -inf
          %157 = vst.msk [vmem:[#allocation2 + $0x50] sm:$0xff] %vm146, -inf
          %158 = vst.msk [vmem:[#allocation2 + $0x58] sm:$0xff] %vm146, -inf
          %159 = vst.msk [vmem:[#allocation2 + $0x60] sm:$0xff] %vm146, -inf
          %160 = vst.msk [vmem:[#allocation2 + $0x68] sm:$0xff] %vm146, -inf
          %161 = vst.msk [vmem:[#allocation2 + $0x70] sm:$0xff] %vm146, -inf
          %162 = vst.msk [vmem:[#allocation2 + $0x78] sm:$0xff] %vm146, -inf
        $region28: #{tpu_custom_call.1} parent=23 // pred_fallthru
          _
        %v163 = vld [vmem:[%s140] sm:$0xff]
        %v164 = vld [vmem:[%s140 + $0x8] sm:$0xff]
        %v165 = vld [vmem:[%s140 + $0x10] sm:$0xff]
        %v166 = vld [vmem:[%s140 + $0x18] sm:$0xff]
        %v167 = vld [vmem:[%s140 + $0x20] sm:$0xff]
        %v168 = vld [vmem:[%s140 + $0x28] sm:$0xff]
        %v169 = vld [vmem:[%s140 + $0x30] sm:$0xff]
        %v170 = vld [vmem:[%s140 + $0x38] sm:$0xff]
        %v171 = vld [vmem:[%s140 + $0x40] sm:$0xff]
        %v172 = vld [vmem:[%s140 + $0x48] sm:$0xff]
        %v173 = vld [vmem:[%s140 + $0x50] sm:$0xff]
        %v174 = vld [vmem:[%s140 + $0x58] sm:$0xff]
        %v175 = vld [vmem:[%s140 + $0x60] sm:$0xff]
        %v176 = vld [vmem:[%s140 + $0x68] sm:$0xff]
        %v177 = vld [vmem:[%s140 + $0x70] sm:$0xff]
        %v178 = vld [vmem:[%s140 + $0x78] sm:$0xff]
        %180 = vset.pattern.permute.xlu0 4
        %181 = vperm.xlu0 %180, %v163
        %v182 = vpop.permute.xlu0 %181
        %185 = vset.pattern.permute.xlu0 4
        %186 = vperm.xlu0 %185, %v164
        %v187 = vpop.permute.xlu0 %186
        %190 = vset.pattern.permute.xlu0 4
        %191 = vperm.xlu0 %190, %v165
        %v192 = vpop.permute.xlu0 %191
        %195 = vset.pattern.permute.xlu0 4
        %196 = vperm.xlu0 %195, %v166
        %v197 = vpop.permute.xlu0 %196
        %200 = vset.pattern.permute.xlu0 4
        %201 = vperm.xlu0 %200, %v167
        %v202 = vpop.permute.xlu0 %201
        %205 = vset.pattern.permute.xlu0 4
        %206 = vperm.xlu0 %205, %v168
        %v207 = vpop.permute.xlu0 %206
        %210 = vset.pattern.permute.xlu0 4
        %211 = vperm.xlu0 %210, %v169
        %v212 = vpop.permute.xlu0 %211
        %215 = vset.pattern.permute.xlu0 4
        %216 = vperm.xlu0 %215, %v170
        %v217 = vpop.permute.xlu0 %216
        %220 = vset.pattern.permute.xlu0 4
        %221 = vperm.xlu0 %220, %v171
        %v222 = vpop.permute.xlu0 %221
        %225 = vset.pattern.permute.xlu0 4
        %226 = vperm.xlu0 %225, %v172
        %v227 = vpop.permute.xlu0 %226
        %230 = vset.pattern.permute.xlu0 4
        %231 = vperm.xlu0 %230, %v173
        %v232 = vpop.permute.xlu0 %231
        %235 = vset.pattern.permute.xlu0 4
        %236 = vperm.xlu0 %235, %v174
        %v237 = vpop.permute.xlu0 %236
        %240 = vset.pattern.permute.xlu0 4
        %241 = vperm.xlu0 %240, %v175
        %v242 = vpop.permute.xlu0 %241
        %245 = vset.pattern.permute.xlu0 4
        %246 = vperm.xlu0 %245, %v176
        %v247 = vpop.permute.xlu0 %246
        %250 = vset.pattern.permute.xlu0 4
        %251 = vperm.xlu0 %250, %v177
        %v252 = vpop.permute.xlu0 %251
        %255 = vset.pattern.permute.xlu0 4
        %256 = vperm.xlu0 %255, %v178
        %v257 = vpop.permute.xlu0 %256
        %v259 = vmul.f32 %v163, %v182
        %v260 = vmul.f32 %v164, %v187
        %v261 = vmul.f32 %v165, %v192
        %v262 = vmul.f32 %v166, %v197
        %v263 = vmul.f32 %v167, %v202
        %v264 = vmul.f32 %v168, %v207
        %v265 = vmul.f32 %v169, %v212
        %v266 = vmul.f32 %v170, %v217
        %v267 = vmul.f32 %v171, %v222
        %v268 = vmul.f32 %v172, %v227
        %v269 = vmul.f32 %v173, %v232
        %v270 = vmul.f32 %v174, %v237
        %v271 = vmul.f32 %v175, %v242
        %v272 = vmul.f32 %v176, %v247
        %v273 = vmul.f32 %v177, %v252
        %v274 = vmul.f32 %v178, %v257
        %v275 = vlaneseq
        %v276 = vshrl.u32 %v275, 7
        %v277 = vadd.s32 %v276, 8
        %v278 = vadd.s32 %v276, 16
        %v279 = vadd.s32 %v276, 24
        %v280 = vadd.s32 %v276, 32
        %v281 = vadd.s32 %v276, 40
        %v282 = vadd.s32 %v276, 48
        %v283 = vadd.s32 %v276, 56
        %v284 = vadd.s32 %v276, 64
        %v285 = vadd.s32 %v276, 72
        %v286 = vadd.s32 %v276, 80
        %v287 = vadd.s32 %v276, 88
        %v288 = vadd.s32 %v276, 96
        %v289 = vadd.s32 %v276, 104
        %v290 = vadd.s32 %v276, 112
        %v291 = vadd.s32 %v276, 120
        %s292 = smul.u32 %s20, 128
        %v293 = vstv %s292
        %v294 = vadd.s32 %v276, %v293
        %v295 = vadd.s32 %v277, %v293
        %v296 = vadd.s32 %v278, %v293
        %v297 = vadd.s32 %v279, %v293
        %v298 = vadd.s32 %v280, %v293
        %v299 = vadd.s32 %v281, %v293
        %v300 = vadd.s32 %v282, %v293
        %v301 = vadd.s32 %v283, %v293
        %v302 = vadd.s32 %v284, %v293
        %v303 = vadd.s32 %v285, %v293
        %v304 = vadd.s32 %v286, %v293
        %v305 = vadd.s32 %v287, %v293
        %v306 = vadd.s32 %v288, %v293
        %v307 = vadd.s32 %v289, %v293
        %v308 = vadd.s32 %v290, %v293
        %v309 = vadd.s32 %v291, %v293
        %vm310 = vcmp.lt.s32.totalorder %v294, 512
        %vm311 = vcmp.lt.s32.totalorder %v295, 512
        %vm312 = vcmp.lt.s32.totalorder %v296, 512
        %vm313 = vcmp.lt.s32.totalorder %v297, 512
        %vm314 = vcmp.lt.s32.totalorder %v298, 512
        %vm315 = vcmp.lt.s32.totalorder %v299, 512
        %vm316 = vcmp.lt.s32.totalorder %v300, 512
        %vm317 = vcmp.lt.s32.totalorder %v301, 512
        %vm318 = vcmp.lt.s32.totalorder %v302, 512
        %vm319 = vcmp.lt.s32.totalorder %v303, 512
        %vm320 = vcmp.lt.s32.totalorder %v304, 512
        %vm321 = vcmp.lt.s32.totalorder %v305, 512
        %vm322 = vcmp.lt.s32.totalorder %v306, 512
        %vm323 = vcmp.lt.s32.totalorder %v307, 512
        %vm324 = vcmp.lt.s32.totalorder %v308, 512
        %vm325 = vcmp.lt.s32.totalorder %v309, 512
        %v326 = vsel %vm310, %v259, -inf
        %v327 = vsel %vm311, %v260, -inf
        %v328 = vsel %vm312, %v261, -inf
        %v329 = vsel %vm313, %v262, -inf
        %v330 = vsel %vm314, %v263, -inf
        %v331 = vsel %vm315, %v264, -inf
        %v332 = vsel %vm316, %v265, -inf
        %v333 = vsel %vm317, %v266, -inf
        %v334 = vsel %vm318, %v267, -inf
        %v335 = vsel %vm319, %v268, -inf
        %v336 = vsel %vm320, %v269, -inf
        %v337 = vsel %vm321, %v270, -inf
        %v338 = vsel %vm322, %v271, -inf
        %v339 = vsel %vm323, %v272, -inf
        %v340 = vsel %vm324, %v273, -inf
        %v341 = vsel %vm325, %v274, -inf
        %v342 = vld [vmem:[#allocation2] sm:$0xff]
        %v343 = vld [vmem:[#allocation2 + $0x8] sm:$0xff]
        %v344 = vld [vmem:[#allocation2 + $0x10] sm:$0xff]
        %v345 = vld [vmem:[#allocation2 + $0x18] sm:$0xff]
        %v346 = vld [vmem:[#allocation2 + $0x20] sm:$0xff]
        %v347 = vld [vmem:[#allocation2 + $0x28] sm:$0xff]
        %v348 = vld [vmem:[#allocation2 + $0x30] sm:$0xff]
        %v349 = vld [vmem:[#allocation2 + $0x38] sm:$0xff]
        %v350 = vld [vmem:[#allocation2 + $0x40] sm:$0xff]
        %v351 = vld [vmem:[#allocation2 + $0x48] sm:$0xff]
        %v352 = vld [vmem:[#allocation2 + $0x50] sm:$0xff]
        %v353 = vld [vmem:[#allocation2 + $0x58] sm:$0xff]
        %v354 = vld [vmem:[#allocation2 + $0x60] sm:$0xff]
        %v355 = vld [vmem:[#allocation2 + $0x68] sm:$0xff]
        %v356 = vld [vmem:[#allocation2 + $0x70] sm:$0xff]
        %v357 = vld [vmem:[#allocation2 + $0x78] sm:$0xff]
        %v358 = vmax.f32 %v342, %v326
        %v359 = vmax.f32 %v343, %v327
        %v360 = vmax.f32 %v344, %v328
        %v361 = vmax.f32 %v345, %v329
        %v362 = vmax.f32 %v346, %v330
        %v363 = vmax.f32 %v347, %v331
        %v364 = vmax.f32 %v348, %v332
        %v365 = vmax.f32 %v349, %v333
        %v366 = vmax.f32 %v350, %v334
        %v367 = vmax.f32 %v351, %v335
        %v368 = vmax.f32 %v352, %v336
        %v369 = vmax.f32 %v353, %v337
        %v370 = vmax.f32 %v354, %v338
        %v371 = vmax.f32 %v355, %v339
        %v372 = vmax.f32 %v356, %v340
        %v373 = vmax.f32 %v357, %v341
        %vm374 = vcmask 130048
        %375 = vst.msk [vmem:[#allocation2] sm:$0xff] %vm374, %v358
        %376 = vst.msk [vmem:[#allocation2 + $0x8] sm:$0xff] %vm374, %v359
        %377 = vst.msk [vmem:[#allocation2 + $0x10] sm:$0xff] %vm374, %v360
        %378 = vst.msk [vmem:[#allocation2 + $0x18] sm:$0xff] %vm374, %v361
        %379 = vst.msk [vmem:[#allocation2 + $0x20] sm:$0xff] %vm374, %v362
        %380 = vst.msk [vmem:[#allocation2 + $0x28] sm:$0xff] %vm374, %v363
        %381 = vst.msk [vmem:[#allocation2 + $0x30] sm:$0xff] %vm374, %v364
        %382 = vst.msk [vmem:[#allocation2 + $0x38] sm:$0xff] %vm374, %v365
        %383 = vst.msk [vmem:[#allocation2 + $0x40] sm:$0xff] %vm374, %v366
        %384 = vst.msk [vmem:[#allocation2 + $0x48] sm:$0xff] %vm374, %v367
        %385 = vst.msk [vmem:[#allocation2 + $0x50] sm:$0xff] %vm374, %v368
        %386 = vst.msk [vmem:[#allocation2 + $0x58] sm:$0xff] %vm374, %v369
        %387 = vst.msk [vmem:[#allocation2 + $0x60] sm:$0xff] %vm374, %v370
        %388 = vst.msk [vmem:[#allocation2 + $0x68] sm:$0xff] %vm374, %v371
        %389 = vst.msk [vmem:[#allocation2 + $0x70] sm:$0xff] %vm374, %v372
        %390 = vst.msk [vmem:[#allocation2 + $0x78] sm:$0xff] %vm374, %v373
        %p391 = scmp.eq.s32.totalorder %s20, 3
        // Predicated region
        $region29: #{tpu_custom_call.1} parent=23 // pred_check
          %p392 = pneg %p391
        $region30: #{tpu_custom_call.1} parent=23 // pred_check_branch
          %394 = sbr.rel (%p392) target = $region32
        $region31: #{tpu_custom_call.1} parent=23 // pred_region
          %v395 = vld [vmem:[#allocation2] sm:$0xff]
          %v396 = vld [vmem:[#allocation2 + $0x8] sm:$0xff]
          %v397 = vld [vmem:[#allocation2 + $0x10] sm:$0xff]
          %v398 = vld [vmem:[#allocation2 + $0x18] sm:$0xff]
          %v399 = vld [vmem:[#allocation2 + $0x20] sm:$0xff]
          %v400 = vld [vmem:[#allocation2 + $0x28] sm:$0xff]
          %v401 = vld [vmem:[#allocation2 + $0x30] sm:$0xff]
          %v402 = vld [vmem:[#allocation2 + $0x38] sm:$0xff]
          %v403 = vld [vmem:[#allocation2 + $0x40] sm:$0xff]
          %v404 = vld [vmem:[#allocation2 + $0x48] sm:$0xff]
          %v405 = vld [vmem:[#allocation2 + $0x50] sm:$0xff]
          %v406 = vld [vmem:[#allocation2 + $0x58] sm:$0xff]
          %v407 = vld [vmem:[#allocation2 + $0x60] sm:$0xff]
          %v408 = vld [vmem:[#allocation2 + $0x68] sm:$0xff]
          %v409 = vld [vmem:[#allocation2 + $0x70] sm:$0xff]
          %v410 = vld [vmem:[#allocation2 + $0x78] sm:$0xff]
          %v411 = vsel %vm374, %v395, -inf
          %v412 = vsel %vm374, %v396, -inf
          %v413 = vsel %vm374, %v397, -inf
          %v414 = vsel %vm374, %v398, -inf
          %v415 = vsel %vm374, %v399, -inf
          %v416 = vmax.f32 %v411, %v415
          %v417 = vsel %vm374, %v400, -inf
          %v418 = vmax.f32 %v412, %v417
          %v419 = vsel %vm374, %v401, -inf
          %v420 = vmax.f32 %v413, %v419
          %v421 = vsel %vm374, %v402, -inf
          %v422 = vmax.f32 %v414, %v421
          %v423 = vsel %vm374, %v403, -inf
          %v424 = vmax.f32 %v416, %v423
          %v425 = vsel %vm374, %v404, -inf
          %v426 = vmax.f32 %v418, %v425
          %v427 = vsel %vm374, %v405, -inf
          %v428 = vmax.f32 %v420, %v427
          %v429 = vsel %vm374, %v406, -inf
          %v430 = vmax.f32 %v422, %v429
          %v431 = vsel %vm374, %v407, -inf
          %v432 = vmax.f32 %v424, %v431
          %v433 = vsel %vm374, %v408, -inf
          %v434 = vmax.f32 %v426, %v433
          %v435 = vsel %vm374, %v409, -inf
          %v436 = vmax.f32 %v428, %v435
          %v437 = vsel %vm374, %v410, -inf
          %v438 = vmax.f32 %v430, %v437
          %v439 = vmax.f32 %v432, %v434
          %v440 = vmax.f32 %v436, %v438
          %v441 = vmax.f32 %v439, %v440
          %v442 = vrot.slane %v441, 4
          %v443 = vmax.f32 %v441, %v442
          %v444 = vrot.slane %v443, 2
          %v445 = vmax.f32 %v443, %v444
          %v446 = vrot.slane %v445, 1
          %v447 = vmax.f32 %v445, %v446
          %vm448 = vcmask 122880
          %449 = vst.msk [vmem:[%s131] sm:$0x1] %vm448, %v447
        $region32: #{tpu_custom_call.1} parent=23 // pred_fallthru
          _
        %s450 = sand.u32 %s63, 1
        %s451 = scalar_lea.sflag [#allocation4], %s450
        %s452 = sand.u32 %s63, 1
        %s453 = scalar_lea.vmem [#allocation3], %s452
        // Predicated region
        $region33: #{tpu_custom_call.1} parent=23 // pred_check
          %p454 = pneg %p73
        $region34: #{tpu_custom_call.1} parent=23 // pred_check_branch
          %456 = sbr.rel (%p454) target = $region36
        $region35: #{tpu_custom_call.1} parent=23 // pred_region
          %458 = vsyncadd %s451, 0
          %s459 = scalar_lea.hbm %s1, %s19
          %s461 = sshll.u32 %s453, 4
          %s462 = int_to_ptr.vmem [resolvable:$true] %s461
          %s463 = sshll.u32 %s459, 4
          %s464 = int_to_ptr.hbm [resolvable:$true] %s463
          %466 = dma.vmem_to_hbm [thread:$0]  %s462, 16, %s464, %s451
        $region36: #{tpu_custom_call.1} parent=23 // pred_fallthru
          _
      $region24: #{tpu_custom_call.1} parent=5 // pred_fallthru
        _
      %p467 = scmp.le.s32.totalorder 2, %s10
      // Predicated region
      $region37: #{tpu_custom_call.1} parent=5 // pred_check
        %p468 = pneg %p467
      $region38: #{tpu_custom_call.1} parent=5 // pred_check_branch
        %470 = sbr.rel (%p468) target = $region40
      $region39: #{tpu_custom_call.1} parent=5 // pred_region
        %s471 = ssub.s32 %s10, 2
        // Predicated region
        $region41: #{tpu_custom_call.1} parent=39 // pred_check
          %p472 = pneg %p79
        $region42: #{tpu_custom_call.1} parent=39 // pred_check_branch
          %474 = sbr.rel (%p472) target = $region44
        $region43: #{tpu_custom_call.1} parent=39 // pred_region
          %s475 = sand.u32 %s64, 1
          %s476 = scalar_lea.sflag [#allocation4], %s475
          %s477 = sand.u32 %s64, 1
          %s478 = scalar_lea.vmem [#allocation3], %s477
          %480 = dma.done %s476, 16
        $region44: #{tpu_custom_call.1} parent=39 // pred_fallthru
          _
      $region40: #{tpu_custom_call.1} parent=5 // pred_fallthru
        _
    $region6: #{tpu_custom_call.1} parent=1 // loop_footer
      %s14 = sadd.s32 1, %s10
    $region7: #{tpu_custom_call.1} parent=1 // loop_footer_branch
      %9 = sbr.rel target = $region3
    $region8: #{tpu_custom_call.1} parent=1 // loop_exit
      _
    %481 = vsyncpa [#allocation4], 1
    %s482 = scalar_lea.sflag [#allocation4], 1
    %483 = vsyncpa %s482, 1

</llo_original>
